<compile_context>
chip_gen: v7x
topology: tpu7x:2x2x1
jax: 0.10.0
libtpu: 0.0.40
codegen_flags: <defaults>
</compile_context>

<pallas_src>
import functools
import math

import jax
import jax.numpy as jnp
from jax.experimental import pallas as pl
from jax.experimental.pallas import tpu as pltpu


_MASK_VALUE = -1e30  # finite "masked" score: exp() underflows to 0, no NaN rows


def _pick_tile(s, candidates=(256, 128)):
    """Largest MXU/lane-friendly tile that evenly divides `s` (falls back to `s`)."""
    for t in candidates:
        if s % t == 0:
            return t
    return s


def _sdpa_flash_body(q_ref, k_ref, v_ref, bias_ref, out_ref, attn_ref,
                     m_scr, l_scr, acc_scr, p_scr, mh_scr, *, scale, n_kv, tk):
    """One (batch*head, q-tile, kv-tile) grid step of online-softmax attention.

    bias_ref / attn_ref / p_scr / mh_scr may be None (decided at trace time) for the
    mask-free / attention-free kernel variants.
    """
    ki = pl.program_id(2)

    @pl.when(ki == 0)
    def _init():
        m_scr[...] = jnp.full_like(m_scr, -jnp.inf)
        l_scr[...] = jnp.zeros_like(l_scr)
        acc_scr[...] = jnp.zeros_like(acc_scr)
        # p_scr / mh_scr need no init: every block is written before it is read.

    # Fold 1/sqrt(d_k) into the (tq, D) Q tile; a Python-float scale keeps the input
    # dtype (bf16 inputs hit the MXU as bf16).
    q = q_ref[0] * scale
    k = k_ref[0]
    v = v_ref[0]

    # scores = q @ k^T with f32 accumulation on the MXU.
    s = jax.lax.dot_general(q, k, (((1,), (1,)), ((), ())),
                            preferred_element_type=jnp.float32)
    if bias_ref is not None:
        # Additive mask bias: 0.0 keep / -1e30 drop (no compare+select in-kernel).
        s = s + bias_ref[0].astype(jnp.float32)

    # Online softmax update.
    m_prev = m_scr[...]
    m_new = jnp.maximum(m_prev, jnp.max(s, axis=-1, keepdims=True))
    alpha = jnp.exp(m_prev - m_new)            # == 0 exactly on the first kv step
    p = jnp.exp(s - m_new)                     # (tq, tk) f32, relative to running max
    l_scr[...] = alpha * l_scr[...] + jnp.sum(p, axis=-1, keepdims=True)
    acc_scr[...] = alpha * acc_scr[...] + jax.lax.dot_general(
        p.astype(v.dtype), v, (((1,), (0,)), ((), ())),
        preferred_element_type=jnp.float32)
    m_scr[...] = m_new

    if p_scr is not None:
        # Store the unnormalized block once plus the running max it is relative to;
        # the exp(m_block - m_final)/l correction is applied once at finalize (no
        # per-step rescaling of all previously stored blocks).
        p_scr[ki] = p
        mh_scr[ki] = m_new

    @pl.when(ki == n_kv - 1)
    def _finalize():
        m_final = m_scr[...]
        l = l_scr[...]
        inv_l = pl.reciprocal(l, approx=True)   # EUP slot, co-issues with VPU/MXU work
        inv_l = inv_l * (2.0 - l * inv_l)       # one Newton step -> ~f32 accuracy
        out_ref[0] = (acc_scr[...] * inv_l).astype(out_ref.dtype)
        if attn_ref is not None:
            # Assemble the lane-dense (tq, Sk) attention strip and write it once.
            for j in range(n_kv):               # static unroll over kv blocks
                corr = jnp.exp(mh_scr[j] - m_final) * inv_l   # (tq, 1), always <= inv_l
                attn_ref[0, :, j * tk:(j + 1) * tk] = (
                    p_scr[j] * corr).astype(attn_ref.dtype)


def _kernel_attn(q, k, v, o, a, m, l, acc, p, mh, *, scale, n_kv, tk):
    _sdpa_flash_body(q, k, v, None, o, a, m, l, acc, p, mh,
                     scale=scale, n_kv=n_kv, tk=tk)


def _kernel_attn_bias(q, k, v, b, o, a, m, l, acc, p, mh, *, scale, n_kv, tk):
    _sdpa_flash_body(q, k, v, b, o, a, m, l, acc, p, mh,
                     scale=scale, n_kv=n_kv, tk=tk)


def _kernel_noattn(q, k, v, o, m, l, acc, *, scale, n_kv, tk):
    _sdpa_flash_body(q, k, v, None, o, None, m, l, acc, None, None,
                     scale=scale, n_kv=n_kv, tk=tk)


def _kernel_noattn_bias(q, k, v, b, o, m, l, acc, *, scale, n_kv, tk):
    _sdpa_flash_body(q, k, v, b, o, None, m, l, acc, None, None,
                     scale=scale, n_kv=n_kv, tk=tk)


def _mask_to_bias(mask, B, H, Sq, Sk, tq, tk):
    """mask==0 -> drop, converted to an additive bias kept at its broadcast-minimal
    batch shape (never materialized to (B*H, Sq, Sk) int32)."""
    m = jnp.asarray(mask)
    while m.ndim < 4:
        m = m[None]
    # bf16 is enough for "0 or very negative" and halves the per-step HBM read.
    bias = jnp.where(m == 0, _MASK_VALUE, 0.0).astype(jnp.bfloat16)
    if m.shape[0] == 1 and m.shape[1] == 1:
        bias = jnp.broadcast_to(bias, (1, 1, Sq, Sk)).reshape(1, Sq, Sk)
        spec = pl.BlockSpec((1, tq, tk), lambda b, qi, ki: (0, qi, ki))
    else:
        bias = jnp.broadcast_to(bias, (B, H, Sq, Sk)).reshape(B * H, Sq, Sk)
        spec = pl.BlockSpec((1, tq, tk), lambda b, qi, ki: (b, qi, ki))
    return bias, spec


def scaled_dot_product_attention(Q, K, V, mask=None, *, return_attn=True,
                                 tq=None, tk=None):
    """Pallas TPU implementation of ScaledDotProductAttention.forward.

    Q: (B, H, Sq, D); K, V: (B, H, Sk, D); mask broadcastable to (B, H, Sq, Sk)
    (positions where mask == 0 are dropped).  Returns (output, attn) like the PyTorch
    module.  With return_attn=False, attn is None and the kernel skips the O(Sq*Sk)
    attention writeback entirely (use it whenever the caller does not need attn).
    tq / tk override the Q / KV tile sizes (e.g. pass 128 on v5e).
    """
    B, H, Sq, D = Q.shape
    Sk = K.shape[-2]
    BH = B * H
    scale = 1.0 / math.sqrt(D)

    q = Q.reshape(BH, Sq, D)
    k = K.reshape(BH, Sk, D)
    v = V.reshape(BH, Sk, D)

    tq = _pick_tile(Sq) if tq is None else tq
    tk = _pick_tile(Sk) if tk is None else tk
    assert Sq % tq == 0 and Sk % tk == 0, "tile sizes must evenly divide Sq / Sk"
    n_q, n_kv = Sq // tq, Sk // tk
    grid = (BH, n_q, n_kv)

    # TODO(synk): for tiny Sq/Sk/D (like the demo shapes) fold several heads into one
    # grid step to fill the (8,128) vreg / MXU tiles; kept per-head here for generality.

    q_spec = pl.BlockSpec((1, tq, D), lambda b, qi, ki: (b, qi, 0))
    kv_spec = pl.BlockSpec((1, tk, D), lambda b, qi, ki: (b, ki, 0))
    o_spec = pl.BlockSpec((1, tq, D), lambda b, qi, ki: (b, qi, 0))
    a_spec = pl.BlockSpec((1, tq, Sk), lambda b, qi, ki: (b, qi, 0))

    in_specs = [q_spec, kv_spec, kv_spec]
    args = [q, k, v]
    if mask is not None:
        bias, bias_spec = _mask_to_bias(mask, B, H, Sq, Sk, tq, tk)
        in_specs.append(bias_spec)
        args.append(bias)

    scratch_shapes = [
        pltpu.VMEM((tq, 1), jnp.float32),   # running row max
        pltpu.VMEM((tq, 1), jnp.float32),   # running row denominator
        pltpu.VMEM((tq, D), jnp.float32),   # f32 output accumulator
    ]
    compiler_params = pltpu.CompilerParams(
        dimension_semantics=("parallel", "parallel", "arbitrary"))
    static = dict(scale=scale, n_kv=n_kv, tk=tk)

    if return_attn:
        # Per-Q-tile probability strip (unnormalized) + per-block running-max history,
        # normalized once and written out on the last kv step.
        scratch_shapes.append(pltpu.VMEM((n_kv, tq, tk), jnp.float32))
        scratch_shapes.append(pltpu.VMEM((n_kv, tq, 1), jnp.float32))
        kernel = functools.partial(
            _kernel_attn_bias if mask is not None else _kernel_attn, **static)
        out, attn = pl.pallas_call(
            kernel,
            out_shape=(jax.ShapeDtypeStruct((BH, Sq, D), Q.dtype),
                       jax.ShapeDtypeStruct((BH, Sq, Sk), Q.dtype)),
            grid=grid,
            in_specs=in_specs,
            out_specs=(o_spec, a_spec),
            scratch_shapes=scratch_shapes,
            compiler_params=compiler_params,
        )(*args)
        return out.reshape(B, H, Sq, D), attn.reshape(B, H, Sq, Sk)

    kernel = functools.partial(
        _kernel_noattn_bias if mask is not None else _kernel_noattn, **static)
    out = pl.pallas_call(
        kernel,
        out_shape=jax.ShapeDtypeStruct((BH, Sq, D), Q.dtype),
        grid=grid,
        in_specs=in_specs,
        out_specs=o_spec,
        scratch_shapes=scratch_shapes,
        compiler_params=compiler_params,
    )(*args)
    return out.reshape(B, H, Sq, D), None


def _reference(Q, K, V, mask=None):
    d_k = Q.shape[-1]
    scores = jnp.einsum("bhqd,bhkd->bhqk", Q, K) / math.sqrt(d_k)
    if mask is not None:
        scores = jnp.where(mask == 0, -jnp.inf, scores)
    attn = jax.nn.softmax(scores, axis=-1)
    out = jnp.einsum("bhqk,bhkd->bhqd", attn, V)
    return out, attn


def _check(name, got, want, atol, rtol):
    got = jnp.asarray(got, jnp.float32)
    want = jnp.asarray(want, jnp.float32)
    ok = bool(jnp.allclose(got, want, atol=atol, rtol=rtol))
    assert ok, f"{name} mismatch: max |err| = {float(jnp.max(jnp.abs(got - want)))}"


if __name__ == "__main__":
    # --- small f32 config (tight correctness check; grid (8, 1, 1)) -------------------
    B, H, Sq, Sk, D = 2, 4, 8, 8, 16
    key = jax.random.PRNGKey(0)
    kq, kk, kvk = jax.random.split(key, 3)
    Q = jax.random.normal(kq, (B, H, Sq, D), dtype=jnp.float32)
    K = jax.random.normal(kk, (B, H, Sk, D), dtype=jnp.float32)
    V = jax.random.normal(kvk, (B, H, Sk, D), dtype=jnp.float32)
    mask = jnp.tril(jnp.ones((Sq, Sk), dtype=jnp.int32))[None, None]  # causal, shared

    out, attn = scaled_dot_product_attention(Q, K, V)
    jax.block_until_ready((out, attn))
    ref_out, ref_attn = _reference(Q, K, V)
    # tolerance covers the approx-reciprocal(+Newton) normalization
    _check("out (no mask)", out, ref_out, 1e-3, 1e-3)
    _check("attn (no mask)", attn, ref_attn, 1e-3, 1e-3)

    out_m, attn_m = scaled_dot_product_attention(Q, K, V, mask=mask)
    jax.block_until_ready((out_m, attn_m))
    ref_out_m, ref_attn_m = _reference(Q, K, V, mask=mask)
    _check("out (mask)", out_m, ref_out_m, 1e-3, 1e-3)
    _check("attn (mask)", attn_m, ref_attn_m, 1e-3, 1e-3)

    out_f, none_attn = scaled_dot_product_attention(Q, K, V, mask=mask,
                                                    return_attn=False)
    jax.block_until_ready(out_f)
    assert none_attn is None
    _check("out (mask, attn-free path)", out_f, ref_out_m, 1e-3, 1e-3)

    # --- larger bf16 config exercising the tiled flash path (grid (4, 2, 2)) ----------
    B2, H2, S2, D2 = 1, 4, 512, 64
    k2 = jax.random.split(jax.random.PRNGKey(1), 3)
    Q2 = jax.random.normal(k2[0], (B2, H2, S2, D2), dtype=jnp.bfloat16)
    K2 = jax.random.normal(k2[1], (B2, H2, S2, D2), dtype=jnp.bfloat16)
    V2 = jax.random.normal(k2[2], (B2, H2, S2, D2), dtype=jnp.bfloat16)
    mask2 = jnp.tril(jnp.ones((S2, S2), dtype=jnp.int32))  # 2-D causal, shared (B, H)

    out2, attn2 = scaled_dot_product_attention(Q2, K2, V2, mask=mask2)
    jax.block_until_ready((out2, attn2))
    ref_out2, ref_attn2 = _reference(Q2.astype(jnp.float32), K2.astype(jnp.float32),
                                     V2.astype(jnp.float32), mask=mask2)
    _check("out (bf16 tiled)", out2, ref_out2, 3e-2, 3e-2)
    _check("attn (bf16 tiled)", attn2, ref_attn2, 3e-2, 3e-2)

    print("KERNEL_OK")
</pallas_src>

<mosaic_0001>
module attributes {stable_mosaic.version = 11 : i64} {
  func.func @_kernel_attn(%arg0: i32, %arg1: i32, %arg2: i32, %arg3: memref<1x8x16xf32, #tpu.memory_space<vmem>>, %arg4: memref<1x8x16xf32, #tpu.memory_space<vmem>>, %arg5: memref<1x8x16xf32, #tpu.memory_space<vmem>>, %arg6: memref<1x8x16xf32, #tpu.memory_space<vmem>>, %arg7: memref<1x8x8xf32, #tpu.memory_space<vmem>>, %arg8: memref<8x1xf32, #tpu.memory_space<vmem>>, %arg9: memref<8x1xf32, #tpu.memory_space<vmem>>, %arg10: memref<8x16xf32, #tpu.memory_space<vmem>>, %arg11: memref<1x8x8xf32, #tpu.memory_space<vmem>>, %arg12: memref<1x8x1xf32, #tpu.memory_space<vmem>>) attributes {dimension_semantics = [#tpu.dimension_semantics<parallel>, #tpu.dimension_semantics<parallel>, #tpu.dimension_semantics<arbitrary>], iteration_bounds = array<i64: 8, 1, 1>, scalar_prefetch = 0 : i64, scratch_operands = 5 : i64, tpu.core_type = #tpu.core_type<tc>, window_params = [{transform_indices = @transform_0, window_bounds = array<i64: 1, 8, 16>}, {transform_indices = @transform_1, window_bounds = array<i64: 1, 8, 16>}, {transform_indices = @transform_2, window_bounds = array<i64: 1, 8, 16>}, {transform_indices = @transform_3, window_bounds = array<i64: 1, 8, 16>}, {transform_indices = @transform_4, window_bounds = array<i64: 1, 8, 8>}]} {
    %c0_i32 = arith.constant 0 : i32
    %0 = arith.cmpi eq, %arg2, %c0_i32 : i32
    %1 = arith.extui %0 : i1 to i32
    %c0_i32_0 = arith.constant 0 : i32
    %2 = arith.cmpi ne, %1, %c0_i32_0 : i32
    scf.if %2 {
      %cst_31 = arith.constant 0xFF800000 : f32
      %45 = vector.broadcast %cst_31 : f32 to vector<8x1xf32>
      %c0_32 = arith.constant 0 : index
      %c0_33 = arith.constant 0 : index
      %46 = vector.load %arg8[%c0_32, %c0_33] : memref<8x1xf32, #tpu.memory_space<vmem>>, vector<8x1xf32>
      tpu.vector_store %arg8[%c0_32, %c0_33], %45 {strides = array<i32>} : memref<8x1xf32, #tpu.memory_space<vmem>>, vector<8x1xf32>,
      %cst_34 = arith.constant 0.000000e+00 : f32
      %47 = vector.broadcast %cst_34 : f32 to vector<8x1xf32>
      %c0_35 = arith.constant 0 : index
      %c0_36 = arith.constant 0 : index
      %48 = vector.load %arg9[%c0_35, %c0_36] : memref<8x1xf32, #tpu.memory_space<vmem>>, vector<8x1xf32>
      tpu.vector_store %arg9[%c0_35, %c0_36], %47 {strides = array<i32>} : memref<8x1xf32, #tpu.memory_space<vmem>>, vector<8x1xf32>,
      %cst_37 = arith.constant 0.000000e+00 : f32
      %49 = vector.broadcast %cst_37 : f32 to vector<8x16xf32>
      %c0_38 = arith.constant 0 : index
      %c0_39 = arith.constant 0 : index
      %50 = vector.load %arg10[%c0_38, %c0_39] : memref<8x16xf32, #tpu.memory_space<vmem>>, vector<8x16xf32>
      tpu.vector_store %arg10[%c0_38, %c0_39], %49 {strides = array<i32>} : memref<8x16xf32, #tpu.memory_space<vmem>>, vector<8x16xf32>,
    } else {
    }
    %c0 = arith.constant 0 : index
    %c0_1 = arith.constant 0 : index
    %c0_2 = arith.constant 0 : index
    %3 = vector.load %arg3[%c0, %c0_1, %c0_2] : memref<1x8x16xf32, #tpu.memory_space<vmem>>, vector<1x8x16xf32>
    %4 = vector.shape_cast %3 : vector<1x8x16xf32> to vector<8x16xf32>
    %cst = arith.constant 2.500000e-01 : f32
    %5 = vector.broadcast %cst : f32 to vector<8x16xf32>
    %6 = arith.mulf %4, %5 : vector<8x16xf32>
    %c0_3 = arith.constant 0 : index
    %c0_4 = arith.constant 0 : index
    %c0_5 = arith.constant 0 : index
    %7 = vector.load %arg4[%c0_3, %c0_4, %c0_5] : memref<1x8x16xf32, #tpu.memory_space<vmem>>, vector<1x8x16xf32>
    %8 = vector.shape_cast %7 : vector<1x8x16xf32> to vector<8x16xf32>
    %c0_6 = arith.constant 0 : index
    %c0_7 = arith.constant 0 : index
    %c0_8 = arith.constant 0 : index
    %9 = vector.load %arg5[%c0_6, %c0_7, %c0_8] : memref<1x8x16xf32, #tpu.memory_space<vmem>>, vector<1x8x16xf32>
    %10 = vector.shape_cast %9 : vector<1x8x16xf32> to vector<8x16xf32>
    %cst_9 = arith.constant dense<0.000000e+00> : vector<8x8xf32>
    %11 = tpu.matmul %6, %8, %cst_9 {dimension_numbers = #tpu.dot_dimension_numbers<[1], [1], [0], [0], [0, 0, 1, 0], [], []>} : vector<8x16xf32>, vector<8x16xf32>, vector<8x8xf32> -> vector<8x8xf32>
    %c0_10 = arith.constant 0 : index
    %c0_11 = arith.constant 0 : index
    %12 = vector.load %arg8[%c0_10, %c0_11] : memref<8x1xf32, #tpu.memory_space<vmem>>, vector<8x1xf32>
    %cst_12 = arith.constant dense<0xFF800000> : vector<8xf32>
    %13 = vector.multi_reduction <maximumf>, %11, %cst_12 [1] : vector<8x8xf32> to vector<8xf32>
    %14 = vector.shape_cast %13 : vector<8xf32> to vector<8x1xf32>
    %15 = arith.maximumf %12, %14 : vector<8x1xf32>
    %16 = arith.subf %12, %15 : vector<8x1xf32>
    %17 = math.exp %16 : vector<8x1xf32>
    %18 = vector.broadcast %15 : vector<8x1xf32> to vector<8x8xf32>
    %19 = arith.subf %11, %18 : vector<8x8xf32>
    %20 = math.exp %19 : vector<8x8xf32>
    %c0_13 = arith.constant 0 : index
    %c0_14 = arith.constant 0 : index
    %21 = vector.load %arg9[%c0_13, %c0_14] : memref<8x1xf32, #tpu.memory_space<vmem>>, vector<8x1xf32>
    %22 = arith.mulf %17, %21 : vector<8x1xf32>
    %cst_15 = arith.constant dense<0.000000e+00> : vector<8xf32>
    %23 = vector.multi_reduction <add>, %20, %cst_15 [1] : vector<8x8xf32> to vector<8xf32>
    %24 = vector.shape_cast %23 : vector<8xf32> to vector<8x1xf32>
    %25 = arith.addf %22, %24 : vector<8x1xf32>
    %c0_16 = arith.constant 0 : index
    %c0_17 = arith.constant 0 : index
    %26 = vector.load %arg9[%c0_16, %c0_17] : memref<8x1xf32, #tpu.memory_space<vmem>>, vector<8x1xf32>
    tpu.vector_store %arg9[%c0_16, %c0_17], %25 {strides = array<i32>} : memref<8x1xf32, #tpu.memory_space<vmem>>, vector<8x1xf32>,
    %c0_18 = arith.constant 0 : index
    %c0_19 = arith.constant 0 : index
    %27 = vector.load %arg10[%c0_18, %c0_19] : memref<8x16xf32, #tpu.memory_space<vmem>>, vector<8x16xf32>
    %28 = vector.broadcast %17 : vector<8x1xf32> to vector<8x16xf32>
    %29 = arith.mulf %28, %27 : vector<8x16xf32>
    %cst_20 = arith.constant dense<0.000000e+00> : vector<8x16xf32>
    %30 = tpu.matmul %20, %10, %cst_20 {dimension_numbers = #tpu.dot_dimension_numbers<[1], [0], [0], [1], [0, 0, 1, 1], [], []>} : vector<8x8xf32>, vector<8x16xf32>, vector<8x16xf32> -> vector<8x16xf32>
    %31 = arith.addf %29, %30 : vector<8x16xf32>
    %c0_21 = arith.constant 0 : index
    %c0_22 = arith.constant 0 : index
    %32 = vector.load %arg10[%c0_21, %c0_22] : memref<8x16xf32, #tpu.memory_space<vmem>>, vector<8x16xf32>
    tpu.vector_store %arg10[%c0_21, %c0_22], %31 {strides = array<i32>} : memref<8x16xf32, #tpu.memory_space<vmem>>, vector<8x16xf32>,
    %c0_23 = arith.constant 0 : index
    %c0_24 = arith.constant 0 : index
    %33 = vector.load %arg8[%c0_23, %c0_24] : memref<8x1xf32, #tpu.memory_space<vmem>>, vector<8x1xf32>
    tpu.vector_store %arg8[%c0_23, %c0_24], %15 {strides = array<i32>} : memref<8x1xf32, #tpu.memory_space<vmem>>, vector<8x1xf32>,
    %34 = arith.index_cast %arg2 : i32 to index
    %c0_25 = arith.constant 0 : index
    %c0_26 = arith.constant 0 : index
    %35 = vector.load %arg11[%34, %c0_25, %c0_26] : memref<1x8x8xf32, #tpu.memory_space<vmem>>, vector<1x8x8xf32>
    %36 = vector.shape_cast %35 : vector<1x8x8xf32> to vector<8x8xf32>
    %37 = vector.shape_cast %20 : vector<8x8xf32> to vector<1x8x8xf32>
    tpu.vector_store %arg11[%34, %c0_25, %c0_26], %37 {strides = array<i32>} : memref<1x8x8xf32, #tpu.memory_space<vmem>>, vector<1x8x8xf32>,
    %38 = arith.index_cast %arg2 : i32 to index
    %c0_27 = arith.constant 0 : index
    %c0_28 = arith.constant 0 : index
    %39 = vector.load %arg12[%38, %c0_27, %c0_28] : memref<1x8x1xf32, #tpu.memory_space<vmem>>, vector<1x8x1xf32>
    %40 = vector.shape_cast %39 : vector<1x8x1xf32> to vector<8x1xf32>
    %41 = vector.shape_cast %15 : vector<8x1xf32> to vector<1x8x1xf32>
    tpu.vector_store %arg12[%38, %c0_27, %c0_28], %41 {strides = array<i32>} : memref<1x8x1xf32, #tpu.memory_space<vmem>>, vector<1x8x1xf32>,
    %c0_i32_29 = arith.constant 0 : i32
    %42 = arith.cmpi eq, %arg2, %c0_i32_29 : i32
    %43 = arith.extui %42 : i1 to i32
    %c0_i32_30 = arith.constant 0 : i32
    %44 = arith.cmpi ne, %43, %c0_i32_30 : i32
    scf.if %44 {
      %c0_31 = arith.constant 0 : index
      %c0_32 = arith.constant 0 : index
      %45 = vector.load %arg8[%c0_31, %c0_32] : memref<8x1xf32, #tpu.memory_space<vmem>>, vector<8x1xf32>
      %c0_33 = arith.constant 0 : index
      %c0_34 = arith.constant 0 : index
      %46 = vector.load %arg9[%c0_33, %c0_34] : memref<8x1xf32, #tpu.memory_space<vmem>>, vector<8x1xf32>
      %47 = tpu.reciprocal %46 {approx = true} : vector<8x1xf32> -> vector<8x1xf32>
      %48 = arith.mulf %46, %47 : vector<8x1xf32>
      %cst_35 = arith.constant 2.000000e+00 : f32
      %49 = vector.broadcast %cst_35 : f32 to vector<8x1xf32>
      %50 = arith.subf %49, %48 : vector<8x1xf32>
      %51 = arith.mulf %47, %50 : vector<8x1xf32>
      %c0_36 = arith.constant 0 : index
      %c0_37 = arith.constant 0 : index
      %52 = vector.load %arg10[%c0_36, %c0_37] : memref<8x16xf32, #tpu.memory_space<vmem>>, vector<8x16xf32>
      %53 = vector.broadcast %51 : vector<8x1xf32> to vector<8x16xf32>
      %54 = arith.mulf %52, %53 : vector<8x16xf32>
      %c0_38 = arith.constant 0 : index
      %c0_39 = arith.constant 0 : index
      %c0_40 = arith.constant 0 : index
      %55 = vector.load %arg6[%c0_38, %c0_39, %c0_40] : memref<1x8x16xf32, #tpu.memory_space<vmem>>, vector<1x8x16xf32>
      %56 = vector.shape_cast %55 : vector<1x8x16xf32> to vector<8x16xf32>
      %57 = vector.shape_cast %54 : vector<8x16xf32> to vector<1x8x16xf32>
      tpu.vector_store %arg6[%c0_38, %c0_39, %c0_40], %57 {strides = array<i32>} : memref<1x8x16xf32, #tpu.memory_space<vmem>>, vector<1x8x16xf32>,
      %c0_41 = arith.constant 0 : index
      %c0_42 = arith.constant 0 : index
      %c0_43 = arith.constant 0 : index
      %58 = vector.load %arg12[%c0_41, %c0_42, %c0_43] : memref<1x8x1xf32, #tpu.memory_space<vmem>>, vector<1x8x1xf32>
      %59 = vector.shape_cast %58 : vector<1x8x1xf32> to vector<8x1xf32>
      %60 = arith.subf %59, %45 : vector<8x1xf32>
      %61 = math.exp %60 : vector<8x1xf32>
      %62 = arith.mulf %61, %51 : vector<8x1xf32>
      %c0_44 = arith.constant 0 : index
      %c0_45 = arith.constant 0 : index
      %c0_46 = arith.constant 0 : index
      %63 = vector.load %arg11[%c0_44, %c0_45, %c0_46] : memref<1x8x8xf32, #tpu.memory_space<vmem>>, vector<1x8x8xf32>
      %64 = vector.shape_cast %63 : vector<1x8x8xf32> to vector<8x8xf32>
      %65 = vector.broadcast %62 : vector<8x1xf32> to vector<8x8xf32>
      %66 = arith.mulf %64, %65 : vector<8x8xf32>
      %c0_47 = arith.constant 0 : index
      %c0_48 = arith.constant 0 : index
      %c0_49 = arith.constant 0 : index
      %67 = vector.load %arg7[%c0_47, %c0_48, %c0_49] : memref<1x8x8xf32, #tpu.memory_space<vmem>>, vector<1x8x8xf32>
      %68 = vector.shape_cast %67 : vector<1x8x8xf32> to vector<8x8xf32>
      %69 = vector.shape_cast %66 : vector<8x8xf32> to vector<1x8x8xf32>
      tpu.vector_store %arg7[%c0_47, %c0_48, %c0_49], %69 {strides = array<i32>} : memref<1x8x8xf32, #tpu.memory_space<vmem>>, vector<1x8x8xf32>,
    } else {
    }
    return
  }
  func.func @transform_0(%arg0: i32, %arg1: i32, %arg2: i32) -> (i32, i32, i32) {
    %c0_i32 = arith.constant 0 : i32
    %c0_i32_0 = arith.constant 0 : i32
    return %arg0, %arg1, %c0_i32 : i32, i32, i32
  }
  func.func @transform_1(%arg0: i32, %arg1: i32, %arg2: i32) -> (i32, i32, i32) {
    %c0_i32 = arith.constant 0 : i32
    %c0_i32_0 = arith.constant 0 : i32
    return %arg0, %arg2, %c0_i32 : i32, i32, i32
  }
  func.func @transform_2(%arg0: i32, %arg1: i32, %arg2: i32) -> (i32, i32, i32) {
    %c0_i32 = arith.constant 0 : i32
    %c0_i32_0 = arith.constant 0 : i32
    return %arg0, %arg2, %c0_i32 : i32, i32, i32
  }
  func.func @transform_3(%arg0: i32, %arg1: i32, %arg2: i32) -> (i32, i32, i32) {
    %c0_i32 = arith.constant 0 : i32
    %c0_i32_0 = arith.constant 0 : i32
    return %arg0, %arg1, %c0_i32 : i32, i32, i32
  }
  func.func @transform_4(%arg0: i32, %arg1: i32, %arg2: i32) -> (i32, i32, i32) {
    %c0_i32 = arith.constant 0 : i32
    %c0_i32_0 = arith.constant 0 : i32
    return %arg0, %arg1, %c0_i32 : i32, i32, i32
  }
}

</mosaic_0001>

<llo_original>
// kernel: tpu_custom_call.1
$region0: #{tpu_custom_call.1}
  #allocation0 [shape = 'u32[]', space=smem, size = 0x4, offset = 0x4, fixed_abs, tag = 'smem constant byte address 0x4 - core index']
  #allocation1 [shape = 'u32[144,128]{1,0:T(1,128)}', space=vmem, size = 0x12000, scoped, tag = 'internal scratch']
  #allocation2 [shape = 'f32[8,1]{1,0:T(8,128)}', space=vmem, size = 0x1000, scoped, tag = 'scratch operand']
  #allocation3 [shape = 'f32[8,1]{1,0:T(8,128)}', space=vmem, size = 0x1000, scoped, tag = 'scratch operand']
  #allocation4 [shape = 'f32[8,16]{1,0:T(8,128)}', space=vmem, size = 0x1000, scoped, tag = 'scratch operand']
  #allocation5 [shape = 'f32[1,8,8]{2,1,0:T(8,128)}', space=vmem, size = 0x1000, scoped, tag = 'scratch operand']
  #allocation6 [shape = 'f32[1,8,1]{2,1,0:T(8,128)}', space=vmem, size = 0x1000, scoped, tag = 'scratch operand']
  %s0 = inlined_call_operand.hbm [shape: f32[8,8,16], index: 0, kind: input, shape index: {}]
  %s1 = inlined_call_operand.hbm [shape: f32[8,8,16], index: 1, kind: input, shape index: {}]
  %s2 = inlined_call_operand.hbm [shape: f32[8,8,16], index: 2, kind: input, shape index: {}]
  %s3 = inlined_call_operand.hbm [shape: f32[8,8,16], index: 3, kind: output, shape index: {0}]
  %s4 = inlined_call_operand.hbm [shape: f32[8,8,8], index: 4, kind: output, shape index: {1}]
  %5 = xla_tuple %s3, %s4
  %s6 = sld [smem:[#allocation0]]
  $region73: #{tpu_custom_call.1} parent=0
    _
  %s8 = ssub.s32 1, %s6
  %s9 = scalar_select 0, %s8, %s6
  $region1: #{tpu_custom_call.1} parent=0
    #allocation7 [shape = 'u8[8192]{0}', space=vmem, size = 0x2000, scoped, tag = 'input window, operand 0']
    #allocation8 [shape = 's32[2]{0}', space=sflag, size = 0x8, scoped, tag = 'scoped memory for tpu_custom_call.1']
    #allocation9 [shape = 's32[2]{0}', space=sflag, size = 0x8, scoped, tag = 'scoped memory for tpu_custom_call.1']
    #allocation10 [shape = 'u8[8192]{0}', space=vmem, size = 0x2000, scoped, tag = 'input window, operand 1']
    #allocation11 [shape = 's32[2]{0}', space=sflag, size = 0x8, scoped, tag = 'scoped memory for tpu_custom_call.1']
    #allocation12 [shape = 'u8[8192]{0}', space=vmem, size = 0x2000, scoped, tag = 'input window, operand 2']
    #allocation13 [shape = 'u8[8192]{0}', space=vmem, size = 0x2000, scoped, tag = 'output window, operand 0']
    #allocation14 [shape = 'u8[8192]{0}', space=vmem, size = 0x2000, scoped, tag = 'output window, operand 1']
    #allocation15 [shape = 's32[2]{0}', space=sflag, size = 0x8, scoped, tag = 'scoped memory for tpu_custom_call.1']
    %10 = vsyncpa [#allocation8], 0
    %s11 = scalar_lea.sflag [#allocation8], 1
    %12 = vsyncpa %s11, 0
    %13 = vsyncpa [#allocation11], 0
    %s14 = scalar_lea.sflag [#allocation11], 1
    %15 = vsyncpa %s14, 0
    %16 = vsyncpa [#allocation9], 0
    %s17 = scalar_lea.sflag [#allocation9], 1
    %18 = vsyncpa %s17, 0
    %19 = vsyncpa [#allocation15], 0
    %s20 = scalar_lea.sflag [#allocation15], 1
    %21 = vsyncpa %s20, 0
    loop: start=0, step=1, limit=10
    $region2: #{tpu_custom_call.1} parent=1 // loop_pre_header
      _
    $region3: #{tpu_custom_call.1} parent=1 // loop_header
      %s23 = sphi 0, %s27
      %p24 = scmp.ge.s32.totalorder %s23, 10
      %s30 = sphi 0, %s49
      %s31 = sphi 0, %s45
      %s32 = sphi 0, %s41
      %s33 = sphi 0, %s30
      %s34 = sphi 0, %s31
      %s35 = sphi 0, %s32
      %s36 = sphi 0, %s33
      %s37 = sphi 0, %s34
      %s38 = sphi 0, %s35
      %s54 = sphi 0, %s56
      %s57 = sphi 0, %s54
      %s58 = sphi 0, %s57
      %s74 = sphi 0, %s58
      %s82 = sphi 0, %s84
      %s85 = sphi 0, %s82
      %s86 = sphi 0, %s85
      %s102 = sphi 0, %s86
      %s110 = sphi 0, %s112
      %s113 = sphi 0, %s110
      %s114 = sphi 0, %s113
      %s130 = sphi 0, %s114
      %s138 = sphi 0, %s140
      %s141 = sphi 0, %s138
      %s142 = sphi 0, %s141
      %s158 = sphi 0, %s142
      %s166 = sphi 0, %s168
      %s169 = sphi 0, %s166
      %s170 = sphi 0, %s169
      %s186 = sphi 0, %s170
    $region4: #{tpu_custom_call.1} parent=1 // loop_header_branch
      %26 = sbr.rel (%p24) target = $region8
    $region5: #{tpu_custom_call.1} parent=1 // loop_body
      %s28 = ssub.s32 %s23, 1
      %s29 = ssub.s32 %s23, 2
      %s39 = sadd.s32 1, %s32
      %p40 = scmp.ge.s32.totalorder %s39, 1
      %s41 = scalar_select %p40, 0, %s39
      %s42 = sadd.s32 1, %s31
      %s43 = scalar_select %p40, %s42, %s31
      %p44 = scmp.ge.s32.totalorder %s43, 1
      %s45 = scalar_select %p44, 0, %s43
      %s46 = sadd.s32 1, %s30
      %s47 = scalar_select %p44, %s46, %s30
      %p48 = scmp.ge.s32.totalorder %s47, 8
      %s49 = scalar_select %p48, 0, %s47
      %s50 = ssub.s32 %s30, %s49
      %s51 = ssub.s32 %s31, %s45
      %s52 = sor.u32 %s50, %s51
      %p53 = scmp.eq.s32.totalorder %s52, 0
      %s55 = sadd.s32 %s54, 1
      %s56 = scalar_select %p53, %s54, %s55
      %p59 = pneg %p53
      %p60 = scmp.eq.s32.totalorder %s23, 7
      %p61 = por %p59, %p60
      %p62 = scmp.ne.s32.totalorder %s54, %s57
      %p63 = scmp.eq.s32.totalorder %s23, 0
      %p64 = por %p62, %p63
      %p65 = scmp.ne.s32.totalorder %s54, %s57
      %p66 = scmp.eq.s32.totalorder %s28, 7
      %p67 = por %p65, %p66
      %p68 = scmp.ne.s32.totalorder %s57, %s58
      %p69 = scmp.eq.s32.totalorder %s28, 0
      %p70 = por %p68, %p69
      %p71 = scmp.ne.s32.totalorder %s57, %s58
      %p72 = scmp.eq.s32.totalorder %s29, 7
      %p73 = por %p71, %p72
      %p75 = scmp.ne.s32.totalorder %s58, %s74
      %p76 = scmp.eq.s32.totalorder %s29, 0
      %p77 = por %p75, %p76
      %s78 = ssub.s32 %s30, %s49
      %s79 = ssub.s32 %s32, %s41
      %s80 = sor.u32 %s78, %s79
      %p81 = scmp.eq.s32.totalorder %s80, 0
      %s83 = sadd.s32 %s82, 1
      %s84 = scalar_select %p81, %s82, %s83
      %p87 = pneg %p81
      %p88 = scmp.eq.s32.totalorder %s23, 7
      %p89 = por %p87, %p88
      %p90 = scmp.ne.s32.totalorder %s82, %s85
      %p91 = scmp.eq.s32.totalorder %s23, 0
      %p92 = por %p90, %p91
      %p93 = scmp.ne.s32.totalorder %s82, %s85
      %p94 = scmp.eq.s32.totalorder %s28, 7
      %p95 = por %p93, %p94
      %p96 = scmp.ne.s32.totalorder %s85, %s86
      %p97 = scmp.eq.s32.totalorder %s28, 0
      %p98 = por %p96, %p97
      %p99 = scmp.ne.s32.totalorder %s85, %s86
      %p100 = scmp.eq.s32.totalorder %s29, 7
      %p101 = por %p99, %p100
      %p103 = scmp.ne.s32.totalorder %s86, %s102
      %p104 = scmp.eq.s32.totalorder %s29, 0
      %p105 = por %p103, %p104
      %s106 = ssub.s32 %s30, %s49
      %s107 = ssub.s32 %s32, %s41
      %s108 = sor.u32 %s106, %s107
      %p109 = scmp.eq.s32.totalorder %s108, 0
      %s111 = sadd.s32 %s110, 1
      %s112 = scalar_select %p109, %s110, %s111
      %p115 = pneg %p109
      %p116 = scmp.eq.s32.totalorder %s23, 7
      %p117 = por %p115, %p116
      %p118 = scmp.ne.s32.totalorder %s110, %s113
      %p119 = scmp.eq.s32.totalorder %s23, 0
      %p120 = por %p118, %p119
      %p121 = scmp.ne.s32.totalorder %s110, %s113
      %p122 = scmp.eq.s32.totalorder %s28, 7
      %p123 = por %p121, %p122
      %p124 = scmp.ne.s32.totalorder %s113, %s114
      %p125 = scmp.eq.s32.totalorder %s28, 0
      %p126 = por %p124, %p125
      %p127 = scmp.ne.s32.totalorder %s113, %s114
      %p128 = scmp.eq.s32.totalorder %s29, 7
      %p129 = por %p127, %p128
      %p131 = scmp.ne.s32.totalorder %s114, %s130
      %p132 = scmp.eq.s32.totalorder %s29, 0
      %p133 = por %p131, %p132
      %s134 = ssub.s32 %s30, %s49
      %s135 = ssub.s32 %s31, %s45
      %s136 = sor.u32 %s134, %s135
      %p137 = scmp.eq.s32.totalorder %s136, 0
      %s139 = sadd.s32 %s138, 1
      %s140 = scalar_select %p137, %s138, %s139
      %p143 = pneg %p137
      %p144 = scmp.eq.s32.totalorder %s23, 7
      %p145 = por %p143, %p144
      %p146 = scmp.ne.s32.totalorder %s138, %s141
      %p147 = scmp.eq.s32.totalorder %s23, 0
      %p148 = por %p146, %p147
      %p149 = scmp.ne.s32.totalorder %s138, %s141
      %p150 = scmp.eq.s32.totalorder %s28, 7
      %p151 = por %p149, %p150
      %p152 = scmp.ne.s32.totalorder %s141, %s142
      %p153 = scmp.eq.s32.totalorder %s28, 0
      %p154 = por %p152, %p153
      %p155 = scmp.ne.s32.totalorder %s141, %s142
      %p156 = scmp.eq.s32.totalorder %s29, 7
      %p157 = por %p155, %p156
      %p159 = scmp.ne.s32.totalorder %s142, %s158
      %p160 = scmp.eq.s32.totalorder %s29, 0
      %p161 = por %p159, %p160
      %s162 = ssub.s32 %s30, %s49
      %s163 = ssub.s32 %s31, %s45
      %s164 = sor.u32 %s162, %s163
      %p165 = scmp.eq.s32.totalorder %s164, 0
      %s167 = sadd.s32 %s166, 1
      %s168 = scalar_select %p165, %s166, %s167
      %p171 = pneg %p165
      %p172 = scmp.eq.s32.totalorder %s23, 7
      %p173 = por %p171, %p172
      %p174 = scmp.ne.s32.totalorder %s166, %s169
      %p175 = scmp.eq.s32.totalorder %s23, 0
      %p176 = por %p174, %p175
      %p177 = scmp.ne.s32.totalorder %s166, %s169
      %p178 = scmp.eq.s32.totalorder %s28, 7
      %p179 = por %p177, %p178
      %p180 = scmp.ne.s32.totalorder %s169, %s170
      %p181 = scmp.eq.s32.totalorder %s28, 0
      %p182 = por %p180, %p181
      %p183 = scmp.ne.s32.totalorder %s169, %s170
      %p184 = scmp.eq.s32.totalorder %s29, 7
      %p185 = por %p183, %p184
      %p187 = scmp.ne.s32.totalorder %s170, %s186
      %p188 = scmp.eq.s32.totalorder %s29, 0
      %p189 = por %p187, %p188
      %p190 = scmp.le.s32.totalorder 1, %s23
      %p191 = scmp.lt.s32.totalorder %s23, 9
      %p192 = pnand %p190, %p191
      %p193 = pneg %p192
      // Predicated region
      $region9: #{tpu_custom_call.1} parent=5 // pred_check
        _
      $region10: #{tpu_custom_call.1} parent=5 // pred_check_branch
        %195 = sbr.rel (%p192) target = $region12
      $region11: #{tpu_custom_call.1} parent=5 // pred_region
        %s196 = ssub.s32 %s23, 1
      $region12: #{tpu_custom_call.1} parent=5 // pred_fallthru
        _
      %p197 = scmp.lt.s32.totalorder %s23, 8
      // Predicated region
      $region13: #{tpu_custom_call.1} parent=5 // pred_check
        %p198 = pneg %p197
      $region14: #{tpu_custom_call.1} parent=5 // pred_check_branch
        %200 = sbr.rel (%p198) target = $region16
      $region15: #{tpu_custom_call.1} parent=5 // pred_region
        // Predicated region
        $region17: #{tpu_custom_call.1} parent=15 // pred_check
          %p201 = pneg %p64
        $region18: #{tpu_custom_call.1} parent=15 // pred_check_branch
          %203 = sbr.rel (%p201) target = $region20
        $region19: #{tpu_custom_call.1} parent=15 // pred_region
          %s204 = sand.u32 %s54, 1
          %s205 = scalar_lea.sflag [#allocation8], %s204
          %s206 = sand.u32 %s54, 1
          %s207 = smul.addr %s206, 8
          %s208 = scalar_lea.vmem [#allocation7], %s207
          %s210 = ssub.s32 128, 128
          %211 = vsyncadd %s205, %s210
          %s212 = sadd.s32 %s31, %s30
          %s213 = smul.addr %s212, 128
          %s214 = scalar_lea.hbm %s0, %s213
          %s216 = sshll.u32 %s208, 4
          %s217 = int_to_ptr.vmem [resolvable:$true] %s216
          %219 = dma.hbm_to_vmem [thread:$0]  %s214, 128, %s217, %s205
        $region20: #{tpu_custom_call.1} parent=15 // pred_fallthru
          _
        // Predicated region
        $region21: #{tpu_custom_call.1} parent=15 // pred_check
          %p220 = pneg %p92
        $region22: #{tpu_custom_call.1} parent=15 // pred_check_branch
          %222 = sbr.rel (%p220) target = $region24
        $region23: #{tpu_custom_call.1} parent=15 // pred_region
          %s223 = sand.u32 %s23, 1
          %s224 = scalar_lea.sflag [#allocation11], %s223
          %s225 = sand.u32 %s82, 1
          %s226 = smul.addr %s225, 8
          %s227 = scalar_lea.vmem [#allocation10], %s226
          %s229 = ssub.s32 128, 128
          %230 = vsyncadd %s224, %s229
          %s231 = sadd.s32 %s32, %s30
          %s232 = smul.addr %s231, 128
          %s233 = scalar_lea.hbm %s1, %s232
          %s235 = sshll.u32 %s227, 4
          %s236 = int_to_ptr.vmem [resolvable:$true] %s235
          %238 = dma.hbm_to_vmem [thread:$0]  %s233, 128, %s236, %s224
        $region24: #{tpu_custom_call.1} parent=15 // pred_fallthru
          _
        // Predicated region
        $region25: #{tpu_custom_call.1} parent=15 // pred_check
          %p239 = pneg %p120
        $region26: #{tpu_custom_call.1} parent=15 // pred_check_branch
          %241 = sbr.rel (%p239) target = $region28
        $region27: #{tpu_custom_call.1} parent=15 // pred_region
          %s242 = sand.u32 %s23, 1
          %s243 = scalar_lea.sflag [#allocation11], %s242
          %s244 = sand.u32 %s110, 1
          %s245 = smul.addr %s244, 8
          %s246 = scalar_lea.vmem [#allocation12], %s245
          %s248 = ssub.s32 128, 128
          %249 = vsyncadd %s243, %s248
          %s250 = sadd.s32 %s32, %s30
          %s251 = smul.addr %s250, 128
          %s252 = scalar_lea.hbm %s2, %s251
          %s254 = sshll.u32 %s246, 4
          %s255 = int_to_ptr.vmem [resolvable:$true] %s254
          %257 = dma.hbm_to_vmem [thread:$0]  %s252, 128, %s255, %s243
        $region28: #{tpu_custom_call.1} parent=15 // pred_fallthru
          _
      $region16: #{tpu_custom_call.1} parent=5 // pred_fallthru
        _
      %p258 = scmp.le.s32.totalorder 1, %s23
      %p259 = scmp.lt.s32.totalorder %s23, 9
      %p260 = pnand %p258, %p259
      %p261 = pneg %p260
      // Predicated region
      $region29: #{tpu_custom_call.1} parent=5 // pred_check
        _
      $region30: #{tpu_custom_call.1} parent=5 // pred_check_branch
        %263 = sbr.rel (%p260) target = $region32
      $region31: #{tpu_custom_call.1} parent=5 // pred_region
        %s264 = ssub.s32 %s23, 1
        %s265 = sand.u32 %s57, 1
        %s266 = scalar_lea.sflag [#allocation8], %s265
        %s267 = sand.u32 %s57, 1
        %s268 = smul.addr %s267, 8
        %s269 = scalar_lea.vmem [#allocation7], %s268
        // Predicated region
        $region33: #{tpu_custom_call.1} parent=31 // pred_check
          %p270 = pneg %p70
        $region34: #{tpu_custom_call.1} parent=31 // pred_check_branch
          %272 = sbr.rel (%p270) target = $region36
        $region35: #{tpu_custom_call.1} parent=31 // pred_region
          %273 = dma.done %s266, 128
        $region36: #{tpu_custom_call.1} parent=31 // pred_fallthru
          _
        %s274 = sand.u32 %s28, 1
        %s275 = scalar_lea.sflag [#allocation11], %s274
        %s276 = sand.u32 %s85, 1
        %s277 = smul.addr %s276, 8
        %s278 = scalar_lea.vmem [#allocation10], %s277
        // Predicated region
        $region37: #{tpu_custom_call.1} parent=31 // pred_check
          %p279 = pneg %p98
        $region38: #{tpu_custom_call.1} parent=31 // pred_check_branch
          %281 = sbr.rel (%p279) target = $region40
        $region39: #{tpu_custom_call.1} parent=31 // pred_region
          %282 = dma.done %s275, 128
        $region40: #{tpu_custom_call.1} parent=31 // pred_fallthru
          _
        %s283 = sand.u32 %s28, 1
        %s284 = scalar_lea.sflag [#allocation11], %s283
        %s285 = sand.u32 %s113, 1
        %s286 = smul.addr %s285, 8
        %s287 = scalar_lea.vmem [#allocation12], %s286
        // Predicated region
        $region41: #{tpu_custom_call.1} parent=31 // pred_check
          %p288 = pneg %p126
        $region42: #{tpu_custom_call.1} parent=31 // pred_check_branch
          %290 = sbr.rel (%p288) target = $region44
        $region43: #{tpu_custom_call.1} parent=31 // pred_region
          %291 = dma.done %s284, 128
        $region44: #{tpu_custom_call.1} parent=31 // pred_fallthru
          _
        %s292 = sand.u32 %s57, 1
        %s293 = scalar_lea.sflag [#allocation8], %s292
        %s294 = sand.u32 %s57, 1
        %s295 = smul.addr %s294, 8
        %s296 = scalar_lea.vmem [#allocation7], %s295
        %p297 = pneg %p70
        %p298 = pneg %p67
        %s299 = sand.u32 %s28, 1
        %s300 = scalar_lea.sflag [#allocation11], %s299
        %s301 = sand.u32 %s85, 1
        %s302 = smul.addr %s301, 8
        %s303 = scalar_lea.vmem [#allocation10], %s302
        %p304 = pneg %p98
        %p305 = pneg %p95
        %s306 = sand.u32 %s28, 1
        %s307 = scalar_lea.sflag [#allocation11], %s306
        %s308 = sand.u32 %s113, 1
        %s309 = smul.addr %s308, 8
        %s310 = scalar_lea.vmem [#allocation12], %s309
        %p311 = pneg %p126
        %p312 = pneg %p123
        %p313 = pneg %p154
        %p314 = pneg %p151
        %s315 = sand.u32 %s141, 1
        %s316 = scalar_lea.sflag [#allocation9], %s315
        %s317 = sand.u32 %s141, 1
        %s318 = smul.addr %s317, 8
        %s319 = scalar_lea.vmem [#allocation13], %s318
        %p320 = pneg %p182
        %p321 = pneg %p179
        %s322 = sand.u32 %s169, 1
        %s323 = scalar_lea.sflag [#allocation15], %s322
        %s324 = sand.u32 %s169, 1
        %s325 = smul.addr %s324, 8
        %s326 = scalar_lea.vmem [#allocation14], %s325
        %p327 = scmp.eq.s32.totalorder %s35, 0
        // Predicated region
        $region45: #{tpu_custom_call.1} parent=31 // pred_check
          %p328 = pneg %p327
        $region46: #{tpu_custom_call.1} parent=31 // pred_check_branch
          %330 = sbr.rel (%p328) target = $region48
        $region47: #{tpu_custom_call.1} parent=31 // pred_region
          %vm331 = vcmask 7168
          %332 = vst.msk [vmem:[#allocation2] sm:$0xff] %vm331, -inf
          %333 = vst.msk [vmem:[#allocation3] sm:$0xff] %vm331, 0.0
          %vm334 = vcmask 130048
          %335 = vst.msk [vmem:[#allocation4] sm:$0xff] %vm334, 0.0
        $region48: #{tpu_custom_call.1} parent=31 // pred_fallthru
          _
        %v336 = vld [vmem:[%s269] sm:$0xff]
        %v337 = vmul.f32 %v336, 0.25
        %v338 = vld [vmem:[%s278] sm:$0xff]
        %v339 = vld [vmem:[%s287] sm:$0xff]
        %vm340 = vcmask 130048
        %v342 = vsel %vm340, %v337, 0
        %v345 = vsel %vm340, %v338, 0
        %347 = vmatprep.subr.mxu0 0.0
        %348 = vmatpush1.xpose.msra.mxu0 %v345
        %349 = vmatprep.subr.mxu0 0.0
        %350 = vmatpush1.xpose.msra.mxu0 0.0
        %351 = vmatprep.subr.mxu0 0.0
        %352 = vmatpush1.xpose.msra.mxu0 0.0
        %353 = vmatprep.subr.mxu0 0.0
        %354 = vmatpush1.xpose.msra.mxu0 0.0
        %355 = vmatprep.subr.mxu0 0.0
        %356 = vmatpush1.xpose.msra.mxu0 0.0
        %357 = vmatprep.subr.mxu0 0.0
        %358 = vmatpush1.xpose.msra.mxu0 0.0
        %359 = vmatprep.subr.mxu0 0.0
        %360 = vmatpush1.xpose.msra.mxu0 0.0
        %361 = vmatprep.subr.mxu0 0.0
        %362 = vmatpush1.xpose.msra.mxu0 0.0
        %363 = vmatprep.subr.mxu0 0.0
        %364 = vmatpush1.xpose.msra.mxu0 0.0
        %365 = vmatprep.subr.mxu0 0.0
        %366 = vmatpush1.xpose.msra.mxu0 0.0
        %367 = vmatprep.subr.mxu0 0.0
        %368 = vmatpush1.xpose.msra.mxu0 0.0
        %369 = vmatprep.subr.mxu0 0.0
        %370 = vmatpush1.xpose.msra.mxu0 0.0
        %371 = vmatprep.subr.mxu0 0.0
        %372 = vmatpush1.xpose.msra.mxu0 0.0
        %373 = vmatprep.subr.mxu0 0.0
        %374 = vmatpush1.xpose.msra.mxu0 0.0
        %375 = vmatprep.subr.mxu0 0.0
        %376 = vmatpush1.xpose.msra.mxu0 0.0
        %377 = vmatprep.subr.mxu0 0.0
        %378 = vmatpush1.xpose.msra.mxu0 0.0
        %379 = vmatprep.subr.mxu0 0.0
        %380 = vmatpush1.xpose.msra.mxu0 0.0
        %381 = vmatprep.subr.mxu0 0.0
        %382 = vmatpush1.xpose.msra.mxu0 0.0
        %383 = vmatprep.subr.mxu0 0.0
        %384 = vmatpush1.xpose.msra.mxu0 0.0
        %385 = vmatprep.subr.mxu0 0.0
        %386 = vmatpush1.xpose.msra.mxu0 0.0
        %387 = vmatprep.subr.mxu0 0.0
        %388 = vmatpush1.xpose.msra.mxu0 0.0
        %389 = vmatprep.subr.mxu0 0.0
        %390 = vmatpush1.xpose.msra.mxu0 0.0
        %391 = vmatprep.subr.mxu0 0.0
        %392 = vmatpush1.xpose.msra.mxu0 0.0
        %393 = vmatprep.subr.mxu0 0.0
        %394 = vmatpush1.xpose.msra.mxu0 0.0
        %395 = vmatprep.subr.mxu0 0.0
        %396 = vmatpush1.xpose.msra.mxu0 0.0
        %397 = vmatprep.subr.mxu0 0.0
        %398 = vmatpush1.xpose.msra.mxu0 0.0
        %399 = vmatprep.subr.mxu0 0.0
        %400 = vmatpush1.xpose.msra.mxu0 0.0
        %401 = vmatprep.subr.mxu0 0.0
        %402 = vmatpush1.xpose.msra.mxu0 0.0
        %403 = vmatprep.subr.mxu0 0.0
        %404 = vmatpush1.xpose.msra.mxu0 0.0
        %405 = vmatprep.subr.mxu0 0.0
        %406 = vmatpush1.xpose.msra.mxu0 0.0
        %407 = vmatprep.subr.mxu0 0.0
        %408 = vmatpush1.xpose.msra.mxu0 0.0
        %409 = vmatprep.subr.mxu0 0.0
        %410 = vmatpush1.xpose.msra.mxu0 0.0
        %411 = vmatprep.mubr.f32.mxu0 0.0
        %412 = vmatmul.mubr.f32.gmra.mrb[0].mxu0 %v342
        %v413 = vpop.f32.mrb[0].mxu0
        %v414 = vadd.f32 0.0, %v413
        %v415 = vpop.f32.mrb[0].mxu0
        %416 = vdwg.mxu0
        %v417 = vld [vmem:[#allocation2] sm:$0xff]
        %vm418 = vcmask 64512
        %v419 = vsel %vm418, %v414, -inf
        %420 = vmax.xlane.f32.xlu0 %v419
        %v421 = vpop.xlane.xlu0 %420
        %v422 = vmax.f32 %v417, %v421
        %v423 = vsub.f32 %v417, %v422
        %v424 = vmul.f32 %v423, 1.442695
        %v425 = vpow.pop %v424
        %427 = vset.pattern.permute.xlu0 0
        %428 = vperm.xlu0 %427, %v422
        %v429 = vpop.permute.xlu0 %428
        %v431 = vsub.f32 %v414, %v429
        %v432 = vmul.f32 %v431, 1.442695
        %v433 = vpow.pop %v432
        %v434 = vld [vmem:[#allocation3] sm:$0xff]
        %v435 = vmul.f32 %v425, %v434
        %v436 = vsel %vm418, %v433, 0.0
        %437 = vadd.xlane.f32.xlu0 %v436
        %v438 = vpop.xlane.xlu0 %437
        %v439 = vadd.f32 %v435, %v438
        %vm440 = vcmask 7168
        %441 = vst.msk [vmem:[#allocation3] sm:$0xff] %vm440, %v439
        %v442 = vld [vmem:[#allocation4] sm:$0xff]
        %444 = vset.pattern.permute.xlu0 0
        %445 = vperm.xlu0 %444, %v425
        %v446 = vpop.permute.xlu0 %445
        %v448 = vmul.f32 %v446, %v442
        %v450 = vsel %vm418, %v433, 0
        %452 = vmatprep.subr.mxu0 0.0
        %453 = vmatpush1.msra.mxu0 %v339
        %454 = vmatprep.subr.mxu0 0.0
        %455 = vmatpush1.msra.mxu0 0.0
        %456 = vmatprep.subr.mxu0 0.0
        %457 = vmatpush1.msra.mxu0 0.0
        %458 = vmatprep.subr.mxu0 0.0
        %459 = vmatpush1.msra.mxu0 0.0
        %460 = vmatprep.subr.mxu0 0.0
        %461 = vmatpush1.msra.mxu0 0.0
        %462 = vmatprep.subr.mxu0 0.0
        %463 = vmatpush1.msra.mxu0 0.0
        %464 = vmatprep.subr.mxu0 0.0
        %465 = vmatpush1.msra.mxu0 0.0
        %466 = vmatprep.subr.mxu0 0.0
        %467 = vmatpush1.msra.mxu0 0.0
        %468 = vmatprep.subr.mxu0 0.0
        %469 = vmatpush1.msra.mxu0 0.0
        %470 = vmatprep.subr.mxu0 0.0
        %471 = vmatpush1.msra.mxu0 0.0
        %472 = vmatprep.subr.mxu0 0.0
        %473 = vmatpush1.msra.mxu0 0.0
        %474 = vmatprep.subr.mxu0 0.0
        %475 = vmatpush1.msra.mxu0 0.0
        %476 = vmatprep.subr.mxu0 0.0
        %477 = vmatpush1.msra.mxu0 0.0
        %478 = vmatprep.subr.mxu0 0.0
        %479 = vmatpush1.msra.mxu0 0.0
        %480 = vmatprep.subr.mxu0 0.0
        %481 = vmatpush1.msra.mxu0 0.0
        %482 = vmatprep.subr.mxu0 0.0
        %483 = vmatpush1.msra.mxu0 0.0
        %484 = vmatprep.subr.mxu0 0.0
        %485 = vmatpush1.msra.mxu0 0.0
        %486 = vmatprep.subr.mxu0 0.0
        %487 = vmatpush1.msra.mxu0 0.0
        %488 = vmatprep.subr.mxu0 0.0
        %489 = vmatpush1.msra.mxu0 0.0
        %490 = vmatprep.subr.mxu0 0.0
        %491 = vmatpush1.msra.mxu0 0.0
        %492 = vmatprep.subr.mxu0 0.0
        %493 = vmatpush1.msra.mxu0 0.0
        %494 = vmatprep.subr.mxu0 0.0
        %495 = vmatpush1.msra.mxu0 0.0
        %496 = vmatprep.subr.mxu0 0.0
        %497 = vmatpush1.msra.mxu0 0.0
        %498 = vmatprep.subr.mxu0 0.0
        %499 = vmatpush1.msra.mxu0 0.0
        %500 = vmatprep.subr.mxu0 0.0
        %501 = vmatpush1.msra.mxu0 0.0
        %502 = vmatprep.subr.mxu0 0.0
        %503 = vmatpush1.msra.mxu0 0.0
        %504 = vmatprep.subr.mxu0 0.0
        %505 = vmatpush1.msra.mxu0 0.0
        %506 = vmatprep.subr.mxu0 0.0
        %507 = vmatpush1.msra.mxu0 0.0
        %508 = vmatprep.subr.mxu0 0.0
        %509 = vmatpush1.msra.mxu0 0.0
        %510 = vmatprep.subr.mxu0 0.0
        %511 = vmatpush1.msra.mxu0 0.0
        %512 = vmatprep.subr.mxu0 0.0
        %513 = vmatpush1.msra.mxu0 0.0
        %514 = vmatprep.subr.mxu0 0.0
        %515 = vmatpush1.msra.mxu0 0.0
        %516 = vmatprep.mubr.f32.mxu0 0.0
        %517 = vmatmul.mubr.f32.gmra.mrb[0].mxu0 %v450
        %v518 = vpop.f32.mrb[0].mxu0
        %v519 = vadd.f32 0.0, %v518
        %v520 = vpop.f32.mrb[0].mxu0
        %521 = vdwg.mxu0
        %v522 = vadd.f32 %v448, %v519
        %523 = vst.msk [vmem:[#allocation4] sm:$0xff] %vm340, %v522
        %524 = vst.msk [vmem:[#allocation2] sm:$0xff] %vm440, %v422
        %s525 = smul.u32 %s35, 8
        %s526 = scalar_lea.vmem [#allocation5], %s525
        %527 = vst.msk [vmem:[%s526] sm:$0xff] %vm418, %v433
        %s528 = scalar_lea.vmem [#allocation6], %s525
        %529 = vst.msk [vmem:[%s528] sm:$0xff] %vm440, %v422
        // Predicated region
        $region49: #{tpu_custom_call.1} parent=31 // pred_check
          %p530 = pneg %p327
        $region50: #{tpu_custom_call.1} parent=31 // pred_check_branch
          %532 = sbr.rel (%p530) target = $region52
        $region51: #{tpu_custom_call.1} parent=31 // pred_region
          %v533 = vld [vmem:[#allocation2] sm:$0xff]
          %v534 = vld [vmem:[#allocation3] sm:$0xff]
          %v535 = vrcp.pop %v534
          %v536 = vmul.f32 %v534, %v535
          %v537 = vsub.f32 2.0, %v536
          %v538 = vmul.f32 %v535, %v537
          %v539 = vld [vmem:[#allocation4] sm:$0xff]
          %541 = vset.pattern.permute.xlu0 0
          %542 = vperm.xlu0 %541, %v538
          %v543 = vpop.permute.xlu0 %542
          %v545 = vmul.f32 %v539, %v543
          %546 = vst.msk [vmem:[%s319] sm:$0xff] %vm340, %v545
          %v547 = vld [vmem:[#allocation6] sm:$0xff]
          %v548 = vsub.f32 %v547, %v533
          %v549 = vmul.f32 %v548, 1.442695
          %v550 = vpow.pop %v549
          %v551 = vmul.f32 %v550, %v538
          %v552 = vld [vmem:[#allocation5] sm:$0xff]
          %554 = vset.pattern.permute.xlu0 0
          %555 = vperm.xlu0 %554, %v551
          %v556 = vpop.permute.xlu0 %555
          %v558 = vmul.f32 %v552, %v556
          %559 = vst.msk [vmem:[%s326] sm:$0xff] %vm418, %v558
        $region52: #{tpu_custom_call.1} parent=31 // pred_fallthru
          _
        %s560 = sand.u32 %s141, 1
        %s561 = scalar_lea.sflag [#allocation9], %s560
        %s562 = sand.u32 %s141, 1
        %s563 = smul.addr %s562, 8
        %s564 = scalar_lea.vmem [#allocation13], %s563
        %s565 = sand.u32 %s169, 1
        %s566 = scalar_lea.sflag [#allocation15], %s565
        %s567 = sand.u32 %s169, 1
        %s568 = smul.addr %s567, 8
        %s569 = scalar_lea.vmem [#allocation14], %s568
        // Predicated region
        $region53: #{tpu_custom_call.1} parent=31 // pred_check
          %p570 = pneg %p151
        $region54: #{tpu_custom_call.1} parent=31 // pred_check_branch
          %572 = sbr.rel (%p570) target = $region56
        $region55: #{tpu_custom_call.1} parent=31 // pred_region
          %s574 = ssub.s32 128, 128
          %575 = vsyncadd %s561, %s574
          %s576 = sadd.s32 %s34, %s33
          %s577 = smul.addr %s576, 128
          %s578 = scalar_lea.hbm %s3, %s577
          %s580 = sshll.u32 %s564, 4
          %s581 = int_to_ptr.vmem [resolvable:$true] %s580
          %583 = dma.vmem_to_hbm [thread:$0]  %s581, 128, %s578, %s561
        $region56: #{tpu_custom_call.1} parent=31 // pred_fallthru
          _
        // Predicated region
        $region57: #{tpu_custom_call.1} parent=31 // pred_check
          %p584 = pneg %p179
        $region58: #{tpu_custom_call.1} parent=31 // pred_check_branch
          %586 = sbr.rel (%p584) target = $region60
        $region59: #{tpu_custom_call.1} parent=31 // pred_region
          %s588 = ssub.s32 128, 128
          %589 = vsyncadd %s566, %s588
          %s590 = sadd.s32 %s34, %s33
          %s591 = smul.addr %s590, 128
          %s592 = scalar_lea.hbm %s4, %s591
          %s594 = sshll.u32 %s569, 4
          %s595 = int_to_ptr.vmem [resolvable:$true] %s594
          %597 = dma.vmem_to_hbm [thread:$0]  %s595, 128, %s592, %s566
        $region60: #{tpu_custom_call.1} parent=31 // pred_fallthru
          _
      $region32: #{tpu_custom_call.1} parent=5 // pred_fallthru
        _
      %p598 = scmp.le.s32.totalorder 2, %s23
      // Predicated region
      $region61: #{tpu_custom_call.1} parent=5 // pred_check
        %p599 = pneg %p598
      $region62: #{tpu_custom_call.1} parent=5 // pred_check_branch
        %601 = sbr.rel (%p599) target = $region64
      $region63: #{tpu_custom_call.1} parent=5 // pred_region
        %s602 = ssub.s32 %s23, 2
        // Predicated region
        $region65: #{tpu_custom_call.1} parent=63 // pred_check
          %p603 = pneg %p157
        $region66: #{tpu_custom_call.1} parent=63 // pred_check_branch
          %605 = sbr.rel (%p603) target = $region68
        $region67: #{tpu_custom_call.1} parent=63 // pred_region
          %s606 = sand.u32 %s142, 1
          %s607 = scalar_lea.sflag [#allocation9], %s606
          %s608 = sand.u32 %s142, 1
          %s609 = smul.addr %s608, 8
          %s610 = scalar_lea.vmem [#allocation13], %s609
          %611 = dma.done %s607, 128
        $region68: #{tpu_custom_call.1} parent=63 // pred_fallthru
          _
        // Predicated region
        $region69: #{tpu_custom_call.1} parent=63 // pred_check
          %p612 = pneg %p185
        $region70: #{tpu_custom_call.1} parent=63 // pred_check_branch
          %614 = sbr.rel (%p612) target = $region72
        $region71: #{tpu_custom_call.1} parent=63 // pred_region
          %s615 = sand.u32 %s170, 1
          %s616 = scalar_lea.sflag [#allocation15], %s615
          %s617 = sand.u32 %s170, 1
          %s618 = smul.addr %s617, 8
          %s619 = scalar_lea.vmem [#allocation14], %s618
          %620 = dma.done %s616, 128
        $region72: #{tpu_custom_call.1} parent=63 // pred_fallthru
          _
      $region64: #{tpu_custom_call.1} parent=5 // pred_fallthru
        _
    $region6: #{tpu_custom_call.1} parent=1 // loop_footer
      %s27 = sadd.s32 1, %s23
    $region7: #{tpu_custom_call.1} parent=1 // loop_footer_branch
      %22 = sbr.rel target = $region3
    $region8: #{tpu_custom_call.1} parent=1 // loop_exit
      _
    %621 = vsyncpa [#allocation8], 1
    %s622 = scalar_lea.sflag [#allocation8], 1
    %623 = vsyncpa %s622, 1
    %624 = vsyncpa [#allocation11], 1
    %s625 = scalar_lea.sflag [#allocation11], 1
    %626 = vsyncpa %s625, 1
    %627 = vsyncpa [#allocation9], 1
    %s628 = scalar_lea.sflag [#allocation9], 1
    %629 = vsyncpa %s628, 1
    %630 = vsyncpa [#allocation15], 1
    %s631 = scalar_lea.sflag [#allocation15], 1
    %632 = vsyncpa %s631, 1

</llo_original>
